<compile_context>
chip_gen: v5e
topology: v5e:2x2
jax: 0.10.0
libtpu: 0.0.40
codegen_flags: <defaults>
</compile_context>

<pallas_src>
import functools

import jax
import jax.numpy as jnp
from jax.experimental import pallas as pl
from jax.experimental.pallas import tpu as pltpu


def _mdn_kernel(x_ref, w1_ref, b1_ref, wh_ref, bh_ref,
                pis_ref, mus_ref, stds_ref):
    k = pis_ref.shape[0]

    # Hidden layer.  Contraction length is 1 -> outer product; do it on the
    # VPU (broadcast multiply + add) instead of the MXU.
    #   (h, 1) * (1, TM) + (h, 1)  ->  (h, TM)
    z = jnp.tanh(w1_ref[...] * x_ref[...] + b1_ref[...])

    # All three heads fused into a single MXU matmul, lane-dense output:
    #   (3k, h) @ (h, TM) + (3k, 1)  ->  (3k, TM)
    heads = (jnp.dot(wh_ref[...], z, preferred_element_type=jnp.float32)
             + bh_ref[...])

    # pis head: softmax over the mixture axis (sublane axis here).
    logits = heads[0:k, :]
    m = jnp.max(logits, axis=0, keepdims=True)
    e = jnp.exp(logits - m)
    pis_ref[...] = e / jnp.sum(e, axis=0, keepdims=True)

    # mus head: plain affine.
    mus_ref[...] = heads[k:2 * k, :]

    # stds head: softplus(x) = max(x, 0) + log1p(exp(-|x|)) (stable form).
    s = heads[2 * k:3 * k, :]
    stds_ref[...] = jnp.maximum(s, 0.0) + jnp.log1p(jnp.exp(-jnp.abs(s)))


@functools.partial(jax.jit, static_argnames=("block_n",))
def mdn_forward(x, params, *, block_n=1024):
    """x: (N, 1) float32.  params in PyTorch nn.Linear layout
    (weight (out, in), bias (out,)).  Returns (pis, mus, stds), each (N, k)."""
    w1, b1 = params["w1"], params["b1"]      # (h, 1), (h,)
    wp, bp = params["wp"], params["bp"]      # (k, h), (k,)
    wm, bm = params["wm"], params["bm"]
    ws, bs = params["ws"], params["bs"]

    N = x.shape[0]
    h = w1.shape[0]
    k = wp.shape[0]

    # Fuse the three head weights/biases once in XLA (not per grid step).
    w1_c = w1                                              # (h, 1)
    b1_c = b1.reshape(h, 1)                                # (h, 1)
    wh = jnp.concatenate([wp, wm, ws], axis=0)             # (3k, h)
    bh = jnp.concatenate([bp, bm, bs], axis=0).reshape(3 * k, 1)

    # Lane-dense layout: batch along the 128-lane axis.
    x_t = x.T                                              # (1, N)

    # Big batch tiles amortize per-grid-step overhead; pad N to a multiple.
    if block_n >= N:
        bn = N                        # single full-extent tile
    else:
        bn = max(128, (block_n // 128) * 128)
    n_pad = -(-N // bn) * bn
    if n_pad != N:
        x_t = jnp.pad(x_t, ((0, 0), (0, n_pad - N)))
    grid = (n_pad // bn,)

    def replicated(shape):
        # tiny weight/bias block, same for every grid step
        return pl.BlockSpec(shape, lambda i: (0, 0))

    def lane_tiled(rows):
        # tile the batch (lane) axis, keep the small row axis whole
        return pl.BlockSpec((rows, bn), lambda i: (0, i))

    out_shapes = tuple(
        jax.ShapeDtypeStruct((k, n_pad), jnp.float32) for _ in range(3)
    )

    pis_t, mus_t, stds_t = pl.pallas_call(
        _mdn_kernel,
        out_shape=out_shapes,
        grid_spec=pltpu.PrefetchScalarGridSpec(
            num_scalar_prefetch=0,
            grid=grid,
            in_specs=[
                lane_tiled(1),             # x        (1, bn)
                replicated((h, 1)),        # w1
                replicated((h, 1)),        # b1
                replicated((3 * k, h)),    # fused head weights
                replicated((3 * k, 1)),    # fused head biases
            ],
            out_specs=[lane_tiled(k), lane_tiled(k), lane_tiled(k)],
        ),
        compiler_params=pltpu.CompilerParams(
            dimension_semantics=("parallel",),
        ),
    )(x_t, w1_c, b1_c, wh, bh)

    # Back to the PyTorch (N, k) layout (cheap XLA transpose in the wrapper).
    pis = pis_t[:, :N].T
    mus = mus_t[:, :N].T
    stds = stds_t[:, :N].T
    return pis, mus, stds


def init_params(key, h=64, k=5):
    """Deterministic nn.Linear-style init: U(-1/sqrt(fan_in), +1/sqrt(fan_in)),
    stored in PyTorch layout (weight (out, in), bias (out,))."""
    keys = jax.random.split(key, 8)

    def linear(kw, kb, fan_in, fan_out):
        bound = 1.0 / jnp.sqrt(float(fan_in))
        w = jax.random.uniform(kw, (fan_out, fan_in), jnp.float32, -bound, bound)
        b = jax.random.uniform(kb, (fan_out,), jnp.float32, -bound, bound)
        return w, b

    w1, b1 = linear(keys[0], keys[1], 1, h)
    wp, bp = linear(keys[2], keys[3], h, k)
    wm, bm = linear(keys[4], keys[5], h, k)
    ws, bs = linear(keys[6], keys[7], h, k)
    return dict(w1=w1, b1=b1, wp=wp, bp=bp, wm=wm, bm=bm, ws=ws, bs=bs)


def mdn_forward_ref(x, params):
    """Pure-JAX reference (PyTorch semantics) for correctness checking."""
    z = jnp.tanh(x @ params["w1"].T + params["b1"])
    pis = jax.nn.softmax(z @ params["wp"].T + params["bp"], axis=1)
    mus = z @ params["wm"].T + params["bm"]
    stds = jax.nn.softplus(z @ params["ws"].T + params["bs"])
    return pis, mus, stds


if __name__ == "__main__":
    key = jax.random.PRNGKey(0)
    k_param, k_x = jax.random.split(key)

    H, K, N = 64, 5, 16  # hidden size (module default), mixture comps, batch
    params = init_params(k_param, h=H, k=K)

    # deterministic example input, shape (N, 1) like torch.linspace(...).reshape(-1, 1)
    x = jax.random.uniform(k_x, (N, 1), jnp.float32, -10.0, 10.0)

    pis, mus, stds = mdn_forward(x, params, block_n=1024)
    jax.block_until_ready((pis, mus, stds))

    # sanity check against pure-JAX reference
    pis_r, mus_r, stds_r = mdn_forward_ref(x, params)
    assert jnp.allclose(pis, pis_r, atol=1e-4, rtol=1e-4), "pis mismatch"
    assert jnp.allclose(mus, mus_r, atol=1e-4, rtol=1e-4), "mus mismatch"
    assert jnp.allclose(stds, stds_r, atol=1e-4, rtol=1e-4), "stds mismatch"
    assert jnp.allclose(jnp.sum(pis, axis=1), 1.0, atol=1e-5), "softmax not normalized"

    print("KERNEL_OK")
</pallas_src>

<mosaic_0001>
module attributes {stable_mosaic.version = 11 : i64} {
  func.func @_mdn_kernel(%arg0: i32, %arg1: memref<1x16xf32, #tpu.memory_space<vmem>>, %arg2: memref<64x1xf32, #tpu.memory_space<vmem>>, %arg3: memref<64x1xf32, #tpu.memory_space<vmem>>, %arg4: memref<15x64xf32, #tpu.memory_space<vmem>>, %arg5: memref<15x1xf32, #tpu.memory_space<vmem>>, %arg6: memref<5x16xf32, #tpu.memory_space<vmem>>, %arg7: memref<5x16xf32, #tpu.memory_space<vmem>>, %arg8: memref<5x16xf32, #tpu.memory_space<vmem>>) attributes {dimension_semantics = [#tpu.dimension_semantics<parallel>], iteration_bounds = array<i64: 1>, scalar_prefetch = 0 : i64, scratch_operands = 0 : i64, tpu.core_type = #tpu.core_type<tc>, window_params = [{transform_indices = @transform_0, window_bounds = array<i64: 1, 16>}, {pipeline_mode = #tpu.pipeline_mode<synchronous>, transform_indices = @transform_1, window_bounds = array<i64: 64, 1>}, {pipeline_mode = #tpu.pipeline_mode<synchronous>, transform_indices = @transform_2, window_bounds = array<i64: 64, 1>}, {pipeline_mode = #tpu.pipeline_mode<synchronous>, transform_indices = @transform_3, window_bounds = array<i64: 15, 64>}, {pipeline_mode = #tpu.pipeline_mode<synchronous>, transform_indices = @transform_4, window_bounds = array<i64: 15, 1>}, {transform_indices = @transform_5, window_bounds = array<i64: 5, 16>}, {transform_indices = @transform_6, window_bounds = array<i64: 5, 16>}, {transform_indices = @transform_7, window_bounds = array<i64: 5, 16>}]} {
    %c0 = arith.constant 0 : index
    %c0_0 = arith.constant 0 : index
    %0 = vector.load %arg2[%c0, %c0_0] : memref<64x1xf32, #tpu.memory_space<vmem>>, vector<64x1xf32>
    %c0_1 = arith.constant 0 : index
    %c0_2 = arith.constant 0 : index
    %1 = vector.load %arg1[%c0_1, %c0_2] : memref<1x16xf32, #tpu.memory_space<vmem>>, vector<1x16xf32>
    %2 = vector.broadcast %0 : vector<64x1xf32> to vector<64x16xf32>
    %3 = vector.broadcast %1 : vector<1x16xf32> to vector<64x16xf32>
    %4 = arith.mulf %2, %3 : vector<64x16xf32>
    %c0_3 = arith.constant 0 : index
    %c0_4 = arith.constant 0 : index
    %5 = vector.load %arg3[%c0_3, %c0_4] : memref<64x1xf32, #tpu.memory_space<vmem>>, vector<64x1xf32>
    %6 = vector.broadcast %5 : vector<64x1xf32> to vector<64x16xf32>
    %7 = arith.addf %4, %6 : vector<64x16xf32>
    %8 = math.tanh %7 : vector<64x16xf32>
    %c0_5 = arith.constant 0 : index
    %c0_6 = arith.constant 0 : index
    %9 = vector.load %arg4[%c0_5, %c0_6] : memref<15x64xf32, #tpu.memory_space<vmem>>, vector<15x64xf32>
    %cst = arith.constant dense<0.000000e+00> : vector<15x16xf32>
    %10 = tpu.matmul %9, %8, %cst {dimension_numbers = #tpu.dot_dimension_numbers<[1], [0], [0], [1], [0, 0, 1, 1], [], []>} : vector<15x64xf32>, vector<64x16xf32>, vector<15x16xf32> -> vector<15x16xf32>
    %c0_7 = arith.constant 0 : index
    %c0_8 = arith.constant 0 : index
    %11 = vector.load %arg5[%c0_7, %c0_8] : memref<15x1xf32, #tpu.memory_space<vmem>>, vector<15x1xf32>
    %12 = vector.broadcast %11 : vector<15x1xf32> to vector<15x16xf32>
    %13 = arith.addf %10, %12 : vector<15x16xf32>
    %14 = vector.extract_strided_slice %13 {offsets = [0, 0], sizes = [5, 16], strides = [1, 1]} : vector<15x16xf32> to vector<5x16xf32>
    %cst_9 = arith.constant dense<0xFF800000> : vector<16xf32>
    %15 = vector.multi_reduction <maximumf>, %14, %cst_9 [0] : vector<5x16xf32> to vector<16xf32>
    %16 = vector.shape_cast %15 : vector<16xf32> to vector<1x16xf32>
    %17 = vector.broadcast %16 : vector<1x16xf32> to vector<5x16xf32>
    %18 = arith.subf %14, %17 : vector<5x16xf32>
    %19 = math.exp %18 : vector<5x16xf32>
    %cst_10 = arith.constant dense<0.000000e+00> : vector<16xf32>
    %20 = vector.multi_reduction <add>, %19, %cst_10 [0] : vector<5x16xf32> to vector<16xf32>
    %21 = vector.shape_cast %20 : vector<16xf32> to vector<1x16xf32>
    %22 = vector.broadcast %21 : vector<1x16xf32> to vector<5x16xf32>
    %23 = arith.divf %19, %22 : vector<5x16xf32>
    %c0_11 = arith.constant 0 : index
    %c0_12 = arith.constant 0 : index
    %24 = vector.load %arg6[%c0_11, %c0_12] : memref<5x16xf32, #tpu.memory_space<vmem>>, vector<5x16xf32>
    tpu.vector_store %arg6[%c0_11, %c0_12], %23 {strides = array<i32>} : memref<5x16xf32, #tpu.memory_space<vmem>>, vector<5x16xf32>,
    %25 = vector.extract_strided_slice %13 {offsets = [5, 0], sizes = [5, 16], strides = [1, 1]} : vector<15x16xf32> to vector<5x16xf32>
    %c0_13 = arith.constant 0 : index
    %c0_14 = arith.constant 0 : index
    %26 = vector.load %arg7[%c0_13, %c0_14] : memref<5x16xf32, #tpu.memory_space<vmem>>, vector<5x16xf32>
    tpu.vector_store %arg7[%c0_13, %c0_14], %25 {strides = array<i32>} : memref<5x16xf32, #tpu.memory_space<vmem>>, vector<5x16xf32>,
    %27 = vector.extract_strided_slice %13 {offsets = [10, 0], sizes = [5, 16], strides = [1, 1]} : vector<15x16xf32> to vector<5x16xf32>
    %cst_15 = arith.constant 0.000000e+00 : f32
    %28 = vector.broadcast %cst_15 : f32 to vector<5x16xf32>
    %29 = arith.maximumf %27, %28 : vector<5x16xf32>
    %30 = math.absf %27 : vector<5x16xf32>
    %cst_16 = arith.constant 0.000000e+00 : f32
    %31 = vector.broadcast %cst_16 : f32 to vector<5x16xf32>
    %32 = arith.subf %31, %30 : vector<5x16xf32>
    %33 = math.exp %32 : vector<5x16xf32>
    %34 = math.log1p %33 : vector<5x16xf32>
    %35 = arith.addf %29, %34 : vector<5x16xf32>
    %c0_17 = arith.constant 0 : index
    %c0_18 = arith.constant 0 : index
    %36 = vector.load %arg8[%c0_17, %c0_18] : memref<5x16xf32, #tpu.memory_space<vmem>>, vector<5x16xf32>
    tpu.vector_store %arg8[%c0_17, %c0_18], %35 {strides = array<i32>} : memref<5x16xf32, #tpu.memory_space<vmem>>, vector<5x16xf32>,
    return
  }
  func.func @transform_0(%arg0: i32) -> (i32, i32) {
    %c0_i32 = arith.constant 0 : i32
    %c0_i32_0 = arith.constant 0 : i32
    return %c0_i32, %arg0 : i32, i32
  }
  func.func @transform_1(%arg0: i32) -> (i32, i32) {
    %c0_i32 = arith.constant 0 : i32
    %c0_i32_0 = arith.constant 0 : i32
    %c0_i32_1 = arith.constant 0 : i32
    return %c0_i32, %c0_i32_0 : i32, i32
  }
  func.func @transform_2(%arg0: i32) -> (i32, i32) {
    %c0_i32 = arith.constant 0 : i32
    %c0_i32_0 = arith.constant 0 : i32
    %c0_i32_1 = arith.constant 0 : i32
    return %c0_i32, %c0_i32_0 : i32, i32
  }
  func.func @transform_3(%arg0: i32) -> (i32, i32) {
    %c0_i32 = arith.constant 0 : i32
    %c0_i32_0 = arith.constant 0 : i32
    %c0_i32_1 = arith.constant 0 : i32
    return %c0_i32, %c0_i32_0 : i32, i32
  }
  func.func @transform_4(%arg0: i32) -> (i32, i32) {
    %c0_i32 = arith.constant 0 : i32
    %c0_i32_0 = arith.constant 0 : i32
    %c0_i32_1 = arith.constant 0 : i32
    return %c0_i32, %c0_i32_0 : i32, i32
  }
  func.func @transform_5(%arg0: i32) -> (i32, i32) {
    %c0_i32 = arith.constant 0 : i32
    %c0_i32_0 = arith.constant 0 : i32
    return %c0_i32, %arg0 : i32, i32
  }
  func.func @transform_6(%arg0: i32) -> (i32, i32) {
    %c0_i32 = arith.constant 0 : i32
    %c0_i32_0 = arith.constant 0 : i32
    return %c0_i32, %arg0 : i32, i32
  }
  func.func @transform_7(%arg0: i32) -> (i32, i32) {
    %c0_i32 = arith.constant 0 : i32
    %c0_i32_0 = arith.constant 0 : i32
    return %c0_i32, %arg0 : i32, i32
  }
}

</mosaic_0001>

<llo_original>
// kernel: mdn_forward.1
$region0: #{mdn_forward.1}
  #allocation0 [shape = 'u32[]', space=smem, size = 0x4, offset = 0x4, fixed_abs, tag = 'smem constant byte address 0x4 - core index']
  #allocation1 [shape = 'u32[72,128]{1,0:T(1,128)}', space=vmem, size = 0x9000, scoped, tag = 'internal scratch']
  %s0 = inlined_call_operand.vmem [shape: f32[1,16], index: 0, kind: input, shape index: {}]
  %s1 = inlined_call_operand.vmem [shape: f32[64,1], index: 1, kind: input, shape index: {}]
  %s2 = inlined_call_operand.vmem [shape: f32[64,1], index: 2, kind: input, shape index: {}]
  %s3 = inlined_call_operand.vmem [shape: f32[15,64], index: 3, kind: input, shape index: {}]
  %s4 = inlined_call_operand.vmem [shape: f32[15,1], index: 4, kind: input, shape index: {}]
  %s5 = inlined_call_operand.hbm [shape: f32[5,16], index: 5, kind: output, shape index: {0}]
  %s6 = inlined_call_operand.hbm [shape: f32[5,16], index: 6, kind: output, shape index: {1}]
  %s7 = inlined_call_operand.hbm [shape: f32[5,16], index: 7, kind: output, shape index: {2}]
  %8 = xla_tuple %s5, %s6, %s7
  %s9 = sld [smem:[#allocation0]]
  $region46: #{mdn_forward.1} parent=0
    _
  %s11 = ssub.s32 1, %s9
  %s12 = scalar_select 0, %s11, %s9
  $region1: #{mdn_forward.1} parent=0
    #allocation2 [shape = 'u8[4096]{0}', space=vmem, size = 0x1000, scoped, tag = 'output window, operand 0, single buffered']
    #allocation3 [shape = 's32[1]{0}', space=sflag, size = 0x4, scoped, tag = 'scoped memory for mdn_forward.1']
    #allocation4 [shape = 'u8[4096]{0}', space=vmem, size = 0x1000, scoped, tag = 'output window, operand 1, single buffered']
    #allocation5 [shape = 's32[1]{0}', space=sflag, size = 0x4, scoped, tag = 'scoped memory for mdn_forward.1']
    #allocation6 [shape = 'u8[4096]{0}', space=vmem, size = 0x1000, scoped, tag = 'output window, operand 2, single buffered']
    %13 = vsyncpa [#allocation3], 0
    %14 = vsyncpa [#allocation5], 0
    // Predicated region
    $region2: #{mdn_forward.1} parent=1 // pred_check
      _
    $region3: #{mdn_forward.1} parent=1 // pred_check_branch
      %16 = sbr.rel (0) target = $region5
    $region4: #{mdn_forward.1} parent=1 // pred_region
      _
    $region5: #{mdn_forward.1} parent=1 // pred_fallthru
      _
    // Predicated region
    $region6: #{mdn_forward.1} parent=1 // pred_check
      _
    $region7: #{mdn_forward.1} parent=1 // pred_check_branch
      %18 = sbr.rel (0) target = $region9
    $region8: #{mdn_forward.1} parent=1 // pred_region
      _
    $region9: #{mdn_forward.1} parent=1 // pred_fallthru
      _
    // Predicated region
    $region10: #{mdn_forward.1} parent=1 // pred_check
      _
    $region11: #{mdn_forward.1} parent=1 // pred_check_branch
      %20 = sbr.rel (0) target = $region13
    $region12: #{mdn_forward.1} parent=1 // pred_region
      _
    $region13: #{mdn_forward.1} parent=1 // pred_fallthru
      _
    // Predicated region
    $region14: #{mdn_forward.1} parent=1 // pred_check
      _
    $region15: #{mdn_forward.1} parent=1 // pred_check_branch
      %22 = sbr.rel (0) target = $region17
    $region16: #{mdn_forward.1} parent=1 // pred_region
      _
    $region17: #{mdn_forward.1} parent=1 // pred_fallthru
      _
    // Predicated region
    $region18: #{mdn_forward.1} parent=1 // pred_check
      _
    $region19: #{mdn_forward.1} parent=1 // pred_check_branch
      %24 = sbr.rel (0) target = $region21
    $region20: #{mdn_forward.1} parent=1 // pred_region
      _
    $region21: #{mdn_forward.1} parent=1 // pred_fallthru
      _
    %v25 = vld [vmem:[%s1] sm:$0xff]
    %v26 = vld [vmem:[%s1 + $0x8] sm:$0xff]
    %v27 = vld [vmem:[%s1 + $0x10] sm:$0xff]
    %v28 = vld [vmem:[%s1 + $0x18] sm:$0xff]
    %v29 = vld [vmem:[%s1 + $0x20] sm:$0xff]
    %v30 = vld [vmem:[%s1 + $0x28] sm:$0xff]
    %v31 = vld [vmem:[%s1 + $0x30] sm:$0xff]
    %v32 = vld [vmem:[%s1 + $0x38] sm:$0xff]
    %v33 = vld [vmem:[%s0] sm:$0x1]
    %35 = vset.pattern.permute.xlu0 0
    %36 = vperm.xlu0 %35, %v25
    %v37 = vpop.permute.xlu0 %36
    %40 = vset.pattern.permute.xlu0 0
    %41 = vperm.xlu0 %40, %v26
    %v42 = vpop.permute.xlu0 %41
    %45 = vset.pattern.permute.xlu0 0
    %46 = vperm.xlu0 %45, %v27
    %v47 = vpop.permute.xlu0 %46
    %50 = vset.pattern.permute.xlu0 0
    %51 = vperm.xlu0 %50, %v28
    %v52 = vpop.permute.xlu0 %51
    %55 = vset.pattern.permute.xlu0 0
    %56 = vperm.xlu0 %55, %v29
    %v57 = vpop.permute.xlu0 %56
    %60 = vset.pattern.permute.xlu0 0
    %61 = vperm.xlu0 %60, %v30
    %v62 = vpop.permute.xlu0 %61
    %65 = vset.pattern.permute.xlu0 0
    %66 = vperm.xlu0 %65, %v31
    %v67 = vpop.permute.xlu0 %66
    %70 = vset.pattern.permute.xlu0 0
    %71 = vperm.xlu0 %70, %v32
    %v72 = vpop.permute.xlu0 %71
    %v75 = vperm.slane %v33, 0
    %v77 = vmul.f32 %v37, %v75
    %v78 = vmul.f32 %v42, %v75
    %v79 = vmul.f32 %v47, %v75
    %v80 = vmul.f32 %v52, %v75
    %v81 = vmul.f32 %v57, %v75
    %v82 = vmul.f32 %v62, %v75
    %v83 = vmul.f32 %v67, %v75
    %v84 = vmul.f32 %v72, %v75
    %v85 = vld [vmem:[%s2] sm:$0xff]
    %v86 = vld [vmem:[%s2 + $0x8] sm:$0xff]
    %v87 = vld [vmem:[%s2 + $0x10] sm:$0xff]
    %v88 = vld [vmem:[%s2 + $0x18] sm:$0xff]
    %v89 = vld [vmem:[%s2 + $0x20] sm:$0xff]
    %v90 = vld [vmem:[%s2 + $0x28] sm:$0xff]
    %v91 = vld [vmem:[%s2 + $0x30] sm:$0xff]
    %v92 = vld [vmem:[%s2 + $0x38] sm:$0xff]
    %94 = vset.pattern.permute.xlu0 0
    %95 = vperm.xlu0 %94, %v85
    %v96 = vpop.permute.xlu0 %95
    %99 = vset.pattern.permute.xlu0 0
    %100 = vperm.xlu0 %99, %v86
    %v101 = vpop.permute.xlu0 %100
    %104 = vset.pattern.permute.xlu0 0
    %105 = vperm.xlu0 %104, %v87
    %v106 = vpop.permute.xlu0 %105
    %109 = vset.pattern.permute.xlu0 0
    %110 = vperm.xlu0 %109, %v88
    %v111 = vpop.permute.xlu0 %110
    %114 = vset.pattern.permute.xlu0 0
    %115 = vperm.xlu0 %114, %v89
    %v116 = vpop.permute.xlu0 %115
    %119 = vset.pattern.permute.xlu0 0
    %120 = vperm.xlu0 %119, %v90
    %v121 = vpop.permute.xlu0 %120
    %124 = vset.pattern.permute.xlu0 0
    %125 = vperm.xlu0 %124, %v91
    %v126 = vpop.permute.xlu0 %125
    %129 = vset.pattern.permute.xlu0 0
    %130 = vperm.xlu0 %129, %v92
    %v131 = vpop.permute.xlu0 %130
    %v133 = vadd.f32 %v77, %v96
    %v134 = vadd.f32 %v78, %v101
    %v135 = vadd.f32 %v79, %v106
    %v136 = vadd.f32 %v80, %v111
    %v137 = vadd.f32 %v81, %v116
    %v138 = vadd.f32 %v82, %v121
    %v139 = vadd.f32 %v83, %v126
    %v140 = vadd.f32 %v84, %v131
    %v141 = vtanh.pop %v133
    %v142 = vtanh.pop %v134
    %v143 = vtanh.pop %v135
    %v144 = vtanh.pop %v136
    %v145 = vtanh.pop %v137
    %v146 = vtanh.pop %v138
    %v147 = vtanh.pop %v139
    %v148 = vtanh.pop %v140
    %v149 = vld [vmem:[%s3] sm:$0xff]
    %v150 = vld [vmem:[%s3 + $0x8] sm:$0x7f]
    %v151 = vld [vmem:[%s4] sm:$0xff]
    %v152 = vld [vmem:[%s4 + $0x8] sm:$0x7f]
    %154 = vset.pattern.permute.xlu0 0
    %155 = vperm.xlu0 %154, %v151
    %v156 = vpop.permute.xlu0 %155
    %159 = vset.pattern.permute.xlu0 0
    %160 = vperm.xlu0 %159, %v152
    %v161 = vpop.permute.xlu0 %160
    %vm163 = vcmask 523264
    %v165 = vsel %vm163, %v149, 0
    %v168 = vsel %vm163, %v150, 0
    %170 = vmatpush.msra.mxu0 0.0
    %171 = vmatpush.msra.mxu0 0.0
    %172 = vmatpush.msra.mxu0 0.0
    %173 = vmatpush.msra.mxu0 0.0
    %174 = vmatpush.msra.mxu0 0.0
    %175 = vmatpush.msra.mxu0 0.0
    %176 = vmatpush.msra.mxu0 0.0
    %177 = vmatpush.msra.mxu0 0.0
    %178 = vmatpush.msra.mxu0 %v148
    %179 = vmatpush.msra.mxu0 %v147
    %180 = vmatpush.msra.mxu0 %v146
    %181 = vmatpush.msra.mxu0 %v145
    %182 = vmatpush.msra.mxu0 %v144
    %183 = vmatpush.msra.mxu0 %v143
    %184 = vmatpush.msra.mxu0 %v142
    %185 = vmatpush.msra.mxu0 %v141
    %186 = vmatmul.f32.gmra.mxu0 %v165
    %v187 = vpop.f32.mrf.mxu0
    %v188 = vadd.f32 %v156, %v187
    %189 = vmatmul.f32.gmra.mxu0 %v168
    %v190 = vpop.f32.mrf.mxu0
    %v191 = vadd.f32 %v161, %v190
    %192 = vdwg.mxu0
    %vm193 = vcmask 126976
    %v194 = vsel %vm193, %v188, -inf
    %v195 = vrot.slane %v194, 4
    %v196 = vmax.f32 %v194, %v195
    %v197 = vrot.slane %v196, 2
    %v198 = vmax.f32 %v196, %v197
    %v199 = vrot.slane %v198, 1
    %v200 = vmax.f32 %v198, %v199
    %v201 = vsub.f32 %v188, %v200
    %v202 = vmul.f32 %v201, 1.442695
    %v203 = vpow.pop %v202
    %v204 = vsel %vm193, %v203, 0.0
    %v205 = vrot.slane %v204, 4
    %v206 = vadd.f32 %v204, %v205
    %v207 = vrot.slane %v206, 2
    %v208 = vadd.f32 %v206, %v207
    %v209 = vrot.slane %v208, 1
    %v210 = vadd.f32 %v208, %v209
    %v211 = vrcp.pop %v210
    %v212 = vmul.f32 %v210, %v211
    %v213 = vsub.f32 1.0, %v212
    %v214 = vmul.f32 %v211, %v213
    %v215 = vadd.f32 %v211, %v214
    %vm216 = vweird.f32 %v210
    %vm217 = vweird.f32 %v211
    %vm218 = vmor %vm216, %vm217
    %v219 = vsel %vm218, %v211, %v215
    %v220 = vand.u32 2147483647, %v210
    %vm221 = vcmp.eq.f32.partialorder %v220, 8.507059e+37
    %v222 = vand.u32 %v210, 2147483648
    %v223 = vor.u32 1.1754944e-38, %v222
    %v224 = vsel %vm221, %v223, %v219
    %v225 = vmul.f32 %v203, %v224
    %226 = vst.msk [vmem:[#allocation2] sm:$0x1f] %vm193, %v225
    %vm227 = vcmask 130053
    %228 = vst.msk [vmem:[#allocation4 - $0x5] sm:$0xe0] %vm227, %v188
    %vm229 = vcmask 123904
    %230 = vst.msk [vmem:[#allocation4 + $0x3] sm:$0x3] %vm229, %v191
    %v231 = vmax.f32 %v191, 0.0
    %v232 = vand.u32 2147483647, %v191
    %v233 = vsub.f32 0.0, %v232
    %v234 = vmul.f32 %v233, 1.442695
    %v235 = vpow.pop %v234
    %v236 = vadd.f32 %v235, 1.0
    %v237 = vlog2.pop %v236
    %v238 = vmul.f32 %v237, 0.6931472
    %v239 = vmul.f32 -0.5, %v235
    %v240 = vadd.f32 %v239, 1.0
    %v241 = vmul.f32 %v240, %v235
    %v242 = vand.u32 2147483647, %v235
    %vm243 = vcmp.lt.f32.partialorder %v242, 0.0004427343
    %v244 = vsel %vm243, %v241, %v238
    %v245 = vadd.f32 %v231, %v244
    %vm246 = vcmask 129026
    %247 = vst.msk [vmem:[#allocation6 - $0x2] sm:$0x7c] %vm246, %v245
    // Predicated region
    $region22: #{mdn_forward.1} parent=1 // pred_check
      _
    $region23: #{mdn_forward.1} parent=1 // pred_check_branch
      %249 = sbr.rel (0) target = $region25
    $region24: #{mdn_forward.1} parent=1 // pred_region
      %251 = vsyncadd [#allocation3], 0
      %s253 = sshll.u32 [#allocation2], 4
      %s254 = int_to_ptr.vmem [resolvable:$true] %s253
      %s255 = sshll.u32 %s5, 4
      %s256 = int_to_ptr.hbm [resolvable:$true] %s255
      %258 = dma.vmem_to_hbm [thread:$0]  %s254, 128, %s256, [#allocation3]
    $region25: #{mdn_forward.1} parent=1 // pred_fallthru
      _
    // Predicated region
    $region26: #{mdn_forward.1} parent=1 // pred_check
      _
    $region27: #{mdn_forward.1} parent=1 // pred_check_branch
      %260 = sbr.rel (0) target = $region29
    $region28: #{mdn_forward.1} parent=1 // pred_region
      %262 = vsyncadd [#allocation5], 0
      %s264 = sshll.u32 [#allocation4], 4
      %s265 = int_to_ptr.vmem [resolvable:$true] %s264
      %s266 = sshll.u32 %s6, 4
      %s267 = int_to_ptr.hbm [resolvable:$true] %s266
      %269 = dma.vmem_to_hbm [thread:$0]  %s265, 128, %s267, [#allocation5]
    $region29: #{mdn_forward.1} parent=1 // pred_fallthru
      _
    // Predicated region
    $region30: #{mdn_forward.1} parent=1 // pred_check
      _
    $region31: #{mdn_forward.1} parent=1 // pred_check_branch
      %271 = sbr.rel (0) target = $region33
    $region32: #{mdn_forward.1} parent=1 // pred_region
      %273 = vsyncadd [#allocation5], 0
      %s275 = sshll.u32 [#allocation6], 4
      %s276 = int_to_ptr.vmem [resolvable:$true] %s275
      %s277 = sshll.u32 %s7, 4
      %s278 = int_to_ptr.hbm [resolvable:$true] %s277
      %280 = dma.vmem_to_hbm [thread:$0]  %s276, 128, %s278, [#allocation5]
    $region33: #{mdn_forward.1} parent=1 // pred_fallthru
      _
    // Predicated region
    $region34: #{mdn_forward.1} parent=1 // pred_check
      _
    $region35: #{mdn_forward.1} parent=1 // pred_check_branch
      %282 = sbr.rel (0) target = $region37
    $region36: #{mdn_forward.1} parent=1 // pred_region
      %284 = dma.done [#allocation3], 128
    $region37: #{mdn_forward.1} parent=1 // pred_fallthru
      _
    // Predicated region
    $region38: #{mdn_forward.1} parent=1 // pred_check
      _
    $region39: #{mdn_forward.1} parent=1 // pred_check_branch
      %286 = sbr.rel (0) target = $region41
    $region40: #{mdn_forward.1} parent=1 // pred_region
      %288 = dma.done [#allocation5], 128
    $region41: #{mdn_forward.1} parent=1 // pred_fallthru
      _
    // Predicated region
    $region42: #{mdn_forward.1} parent=1 // pred_check
      _
    $region43: #{mdn_forward.1} parent=1 // pred_check_branch
      %290 = sbr.rel (0) target = $region45
    $region44: #{mdn_forward.1} parent=1 // pred_region
      %292 = dma.done [#allocation5], 128
    $region45: #{mdn_forward.1} parent=1 // pred_fallthru
      _
    %293 = vsyncpa [#allocation3], 1
    %294 = vsyncpa [#allocation5], 1

</llo_original>
